<compile_context>
chip_gen: v7x
topology: tpu7x:2x2x1
jax: 0.10.0
libtpu: 0.0.40
codegen_flags: <defaults>
</compile_context>

<pallas_src>
import math

import jax
import jax.numpy as jnp
from jax import lax
from jax.experimental import pallas as pl
from jax.experimental.pallas import tpu as pltpu


_LN_EPS = 1e-12
_BN_EPS = 1e-5


def _gen_config():
    """Per-TPU-generation (VMEM limit, preferred row tile)."""
    kind = ""
    try:
        kind = jax.devices()[0].device_kind.lower()
    except Exception:
        pass
    if ("v4" in kind) or ("v5" in kind) or ("v6" in kind):
        # 128 MiB VMEM: bigger tiles amortize per-step pipeline overhead.
        return 96 * 1024 * 1024, 512
    # v7x (64 MiB physical VMEM) and unknown chips: conservative.
    return 48 * 1024 * 1024, 256


_VMEM_LIMIT_BYTES, _ROW_TILE_PREF = _gen_config()


def _cparams(semantics):
    return pltpu.CompilerParams(dimension_semantics=semantics,
                                vmem_limit_bytes=_VMEM_LIMIT_BYTES)


def _row_tile(m, pref=None):
    """Largest bf16-friendly divisor of m (<= pref); prefers multiples of 16."""
    pref = _ROW_TILE_PREF if pref is None else pref
    if m <= pref:
        return m
    for step in (16, 8):
        best = 0
        t = step
        while t <= pref:
            if m % t == 0:
                best = t
            t += step
        if best:
            return best
    # TODO(synk): pad/mask a ragged final tile instead of a full-M fallback.
    return m


# ----------------------------------------------------------------------------
# Fused BERT embeddings: word + positional + token-type add, then LayerNorm.
# Grid over the batch; pos/type/gamma/beta blocks are constant -> VMEM resident.
# ----------------------------------------------------------------------------
def _emb_kernel(x_ref, pos_ref, typ_ref, g_ref, b_ref, o_ref):
    x = x_ref[...] + pos_ref[...] + typ_ref[...]          # [S, H] f32
    mean = jnp.mean(x, axis=-1, keepdims=True)
    xc = x - mean
    var = jnp.mean(xc * xc, axis=-1, keepdims=True)
    y = xc * lax.rsqrt(var + _LN_EPS) * g_ref[...] + b_ref[...]
    o_ref[...] = y.astype(o_ref.dtype)


def pallas_embeddings(x_words, pos_emb, type_row, gamma, beta):
    B, S, H = x_words.shape
    return pl.pallas_call(
        _emb_kernel,
        grid=(B,),
        in_specs=[pl.BlockSpec((None, S, H), lambda b: (b, 0, 0)),
                  pl.BlockSpec((S, H), lambda b: (0, 0)),
                  pl.BlockSpec((1, H), lambda b: (0, 0)),
                  pl.BlockSpec((1, H), lambda b: (0, 0)),
                  pl.BlockSpec((1, H), lambda b: (0, 0))],
        out_specs=pl.BlockSpec((None, S, H), lambda b: (b, 0, 0)),
        out_shape=jax.ShapeDtypeStruct((B, S, H), jnp.bfloat16),
        compiler_params=_cparams(("parallel",)),
    )(x_words, pos_emb, type_row, gamma.reshape(1, H), beta.reshape(1, H))


# ----------------------------------------------------------------------------
# Fused attention block, grid = (batch, head):
#   per (b, h):  qkv_h = x_b @ W_qkv[h]  (K = H, scale pre-folded into W_q)
#                scores -> softmax (bf16 probs) -> ctx_h
#                acc += ctx_h @ W_o[h]
#   at h == nH-1:  y = acc + b_o + x_b (residual) -> LayerNorm -> out (bf16)
# Q/K/V and per-head scores never touch HBM; only one head is live at a time.
# ----------------------------------------------------------------------------
def _make_attn_kernel(num_heads, head_dim):

    def kernel(x_ref, mask_ref, wqkv_ref, bqkv_ref, wo_ref, bo_ref,
               g_ref, be_ref, o_ref, acc_ref):
        h = pl.program_id(1)

        @pl.when(h == 0)
        def _():
            acc_ref[...] = jnp.zeros_like(acc_ref)

        x = x_ref[...]                                          # [S, H] bf16
        # per-head fused QKV projection (K = H full MXU depth)
        qkv = (jnp.dot(x, wqkv_ref[h], preferred_element_type=jnp.float32)
               + bqkv_ref[h]).astype(jnp.bfloat16)              # [S, 3*dH]
        q = qkv[:, :head_dim]                                   # scale folded in
        k = qkv[:, head_dim:2 * head_dim]
        v = qkv[:, 2 * head_dim:]

        s = lax.dot_general(q, k, (((1,), (1,)), ((), ())),
                            preferred_element_type=jnp.float32)  # [S_q, S_k]
        s = s + mask_ref[...]                                    # [1, S_k] broadcast
        s = s - jnp.max(s, axis=-1, keepdims=True)
        p = jnp.exp(s)
        denom = jnp.sum(p, axis=-1, keepdims=True)               # >= 1 after max-sub
        p = (p * pl.reciprocal(denom, approx=True)).astype(jnp.bfloat16)

        ctx = jnp.dot(p, v, preferred_element_type=jnp.float32)  # [S, dH]
        acc_ref[...] += jnp.dot(ctx.astype(jnp.bfloat16), wo_ref[h],
                                preferred_element_type=jnp.float32)

        @pl.when(h == num_heads - 1)
        def _():
            y = acc_ref[...] + bo_ref[...] + x.astype(jnp.float32)   # residual
            mean = jnp.mean(y, axis=-1, keepdims=True)
            yc = y - mean
            var = jnp.mean(yc * yc, axis=-1, keepdims=True)
            o_ref[...] = (yc * lax.rsqrt(var + _LN_EPS) * g_ref[...]
                          + be_ref[...]).astype(o_ref.dtype)

    return kernel


def pallas_attention_block(x, mask_add, w_qkv, b_qkv, w_o, b_o, gamma, beta,
                           num_heads):
    B, S, H = x.shape
    dH = H // num_heads
    bsh = pl.BlockSpec((None, S, H), lambda b, h: (b, 0, 0))
    row = pl.BlockSpec((1, H), lambda b, h: (0, 0))
    return pl.pallas_call(
        _make_attn_kernel(num_heads, dH),
        grid=(B, num_heads),
        in_specs=[bsh,
                  pl.BlockSpec((None, 1, S), lambda b, h: (b, 0, 0)),
                  # packed per-head weights, constant index_map -> resident
                  pl.BlockSpec((num_heads, H, 3 * dH), lambda b, h: (0, 0, 0)),
                  pl.BlockSpec((num_heads, 1, 3 * dH), lambda b, h: (0, 0, 0)),
                  pl.BlockSpec((num_heads, dH, H), lambda b, h: (0, 0, 0)),
                  row, row, row],
        out_specs=bsh,
        out_shape=jax.ShapeDtypeStruct((B, S, H), jnp.bfloat16),
        scratch_shapes=[pltpu.VMEM((S, H), jnp.float32)],
        compiler_params=_cparams(("parallel", "arbitrary")),
    )(x, mask_add, w_qkv, b_qkv, w_o, b_o.reshape(1, H),
      gamma.reshape(1, H), beta.reshape(1, H))


# ----------------------------------------------------------------------------
# Fused FFN block: gelu(x @ W_i + b_i) @ W_out + b_out, + residual, + LayerNorm.
# Tiled over token rows; the [tm, I] intermediate never leaves the chip.
# ----------------------------------------------------------------------------
def _ffn_kernel(x_ref, wi_ref, bi_ref, wo_ref, bo_ref, g_ref, be_ref, o_ref):
    x = x_ref[...]
    h = jnp.dot(x, wi_ref[...], preferred_element_type=jnp.float32) + bi_ref[...]
    # TODO(synk): HF BERT uses the exact erf GELU; tanh approximation used here.
    h = jax.nn.gelu(h, approximate=True)
    y = jnp.dot(h.astype(wo_ref.dtype), wo_ref[...],
                preferred_element_type=jnp.float32)
    y = y + bo_ref[...] + x.astype(jnp.float32)                 # residual
    mean = jnp.mean(y, axis=-1, keepdims=True)
    yc = y - mean
    var = jnp.mean(yc * yc, axis=-1, keepdims=True)
    o_ref[...] = (yc * lax.rsqrt(var + _LN_EPS) * g_ref[...]
                  + be_ref[...]).astype(o_ref.dtype)


def pallas_ffn_ln(x, w_i, b_i, w_out, b_out, gamma, beta):
    M, H = x.shape
    ffn_dim = w_i.shape[1]
    tm = _row_tile(M)
    return pl.pallas_call(
        _ffn_kernel,
        grid=(M // tm,),
        in_specs=[pl.BlockSpec((tm, H), lambda i: (i, 0)),
                  pl.BlockSpec((H, ffn_dim), lambda i: (0, 0)),
                  pl.BlockSpec((1, ffn_dim), lambda i: (0, 0)),
                  pl.BlockSpec((ffn_dim, H), lambda i: (0, 0)),
                  pl.BlockSpec((1, H), lambda i: (0, 0)),
                  pl.BlockSpec((1, H), lambda i: (0, 0)),
                  pl.BlockSpec((1, H), lambda i: (0, 0))],
        out_specs=pl.BlockSpec((tm, H), lambda i: (i, 0)),
        out_shape=jax.ShapeDtypeStruct((M, H), jnp.bfloat16),
        compiler_params=_cparams(("parallel",)),
    )(x, w_i, b_i.reshape(1, ffn_dim), w_out, b_out.reshape(1, H),
      gamma.reshape(1, H), beta.reshape(1, H))


# ----------------------------------------------------------------------------
# Fused projection head + classifier:
#   Linear -> BN(eval) -> ReLU -> Dropout(id) -> Linear -> BN(eval) -> L2-norm,
#   then Linear -> ReLU -> Dropout(id) -> Linear.  (B tiny -> single kernel.)
# ----------------------------------------------------------------------------
def _head_kernel(x_ref, w1_ref, b1_ref, s1_ref, t1_ref,
                 w2_ref, b2_ref, s2_ref, t2_ref,
                 wc1_ref, bc1_ref, wc2_ref, bc2_ref,
                 proj_ref, logit_ref):
    x = x_ref[...].astype(jnp.float32)
    z = jnp.dot(x, w1_ref[...], preferred_element_type=jnp.float32) + b1_ref[...]
    z = jnp.maximum(z * s1_ref[...] + t1_ref[...], 0.0)
    z = jnp.dot(z, w2_ref[...], preferred_element_type=jnp.float32) + b2_ref[...]
    z = z * s2_ref[...] + t2_ref[...]
    # F.normalize(p=2, dim=1): x / max(||x||, eps) == x * rsqrt(max(||x||^2, eps^2))
    ss = jnp.sum(z * z, axis=-1, keepdims=True)
    proj = z * lax.rsqrt(jnp.maximum(ss, 1e-24))
    proj_ref[...] = proj
    hcls = jnp.maximum(
        jnp.dot(proj, wc1_ref[...], preferred_element_type=jnp.float32) + bc1_ref[...],
        0.0)
    logit_ref[...] = jnp.dot(hcls, wc2_ref[...],
                             preferred_element_type=jnp.float32) + bc2_ref[...]


def pallas_head(cls, w1, b1, s1, t1, w2, b2, s2, t2, wc1, bc1, wc2, bc2):
    B, H = cls.shape
    P = w2.shape[1]
    Ph = wc1.shape[1]
    C = wc2.shape[1]

    def fs(shape):
        return pl.BlockSpec(shape, lambda i, _nd=len(shape): (0,) * _nd)

    args = [cls, w1, b1.reshape(1, H), s1.reshape(1, H), t1.reshape(1, H),
            w2, b2.reshape(1, P), s2.reshape(1, P), t2.reshape(1, P),
            wc1, bc1.reshape(1, Ph), wc2, bc2.reshape(1, C)]
    return pl.pallas_call(
        _head_kernel,
        grid=(1,),
        in_specs=[fs(a.shape) for a in args],
        out_specs=(fs((B, P)), fs((B, C))),
        out_shape=(jax.ShapeDtypeStruct((B, P), jnp.float32),
                   jax.ShapeDtypeStruct((B, C), jnp.float32)),
        compiler_params=_cparams(("arbitrary",)),
    )(*args)


# ----------------------------------------------------------------------------
# Parameters (deterministic, synthetic).  Encoder matmul weights in bf16,
# attention weights pre-packed per head with the 1/sqrt(dH) scale folded in.
# ----------------------------------------------------------------------------
def init_params(key, *, vocab, max_pos, H, nH, ffn_dim, L, P, C):
    keys = iter(jax.random.split(key, 16 + 8 * L))

    def nrm(shape, dtype=jnp.float32, std=0.02):
        return (jax.random.normal(next(keys), shape, jnp.float32) * std).astype(dtype)

    bf = jnp.bfloat16
    dH = H // nH
    scale = 1.0 / math.sqrt(dH)

    params = dict(
        num_heads=nH,
        word_emb=nrm((vocab, H)),
        pos_emb=nrm((max_pos, H)),
        type_emb=nrm((2, H)),
        emb_ln_g=jnp.ones((H,), jnp.float32),
        emb_ln_b=jnp.zeros((H,), jnp.float32),
        layers=[],
    )

    def pack_heads(w):                      # [H, H] -> [H, nH, dH]
        return w.reshape(H, nH, dH)

    for _ in range(L):
        w_q, w_k, w_v, w_o = (nrm((H, H)) for _ in range(4))
        b_q = jnp.zeros((H,), jnp.float32)
        b_k = jnp.zeros((H,), jnp.float32)
        b_v = jnp.zeros((H,), jnp.float32)
        # [nH, H, 3*dH]; attention scale folded into the Q half.
        w_qkv = jnp.concatenate([pack_heads(w_q) * scale,
                                 pack_heads(w_k),
                                 pack_heads(w_v)], axis=-1)
        w_qkv = jnp.transpose(w_qkv, (1, 0, 2)).astype(bf)
        b_qkv = jnp.concatenate([b_q.reshape(nH, dH) * scale,
                                 b_k.reshape(nH, dH),
                                 b_v.reshape(nH, dH)], axis=-1).reshape(nH, 1, 3 * dH)
        params["layers"].append(dict(
            w_qkv=w_qkv, b_qkv=b_qkv,
            w_o=w_o.reshape(nH, dH, H).astype(bf),
            b_o=jnp.zeros((H,), jnp.float32),
            ln1_g=jnp.ones((H,), jnp.float32), ln1_b=jnp.zeros((H,), jnp.float32),
            w_i=nrm((H, ffn_dim), bf), b_i=jnp.zeros((ffn_dim,), jnp.float32),
            w_out=nrm((ffn_dim, H), bf), b_out=jnp.zeros((H,), jnp.float32),
            ln2_g=jnp.ones((H,), jnp.float32), ln2_b=jnp.zeros((H,), jnp.float32),
        ))

    params.update(
        proj_w1=nrm((H, H)), proj_b1=jnp.zeros((H,), jnp.float32),
        bn1=dict(gamma=jnp.ones((H,), jnp.float32), beta=jnp.zeros((H,), jnp.float32),
                 mean=jnp.zeros((H,), jnp.float32), var=jnp.ones((H,), jnp.float32)),
        proj_w2=nrm((H, P)), proj_b2=jnp.zeros((P,), jnp.float32),
        bn2=dict(gamma=jnp.ones((P,), jnp.float32), beta=jnp.zeros((P,), jnp.float32),
                 mean=jnp.zeros((P,), jnp.float32), var=jnp.ones((P,), jnp.float32)),
        cls_w1=nrm((P, P // 2)), cls_b1=jnp.zeros((P // 2,), jnp.float32),
        cls_w2=nrm((P // 2, C)), cls_b2=jnp.zeros((C,), jnp.float32),
    )
    return params


def _bn_eval(bn, eps=_BN_EPS):
    scale = bn["gamma"] / jnp.sqrt(bn["var"] + eps)
    shift = bn["beta"] - bn["mean"] * scale
    return scale, shift


# ----------------------------------------------------------------------------
# Forward pass (only the token-id embedding gather and free reshapes stay in XLA).
# ----------------------------------------------------------------------------
def forward(params, input_ids, attention_mask, return_logits=True):
    B, S = input_ids.shape
    H = params["word_emb"].shape[1]
    nH = params["num_heads"]

    # --- BERT embeddings: gather in XLA, adds + LN fused in Pallas ---
    x_words = jnp.take(params["word_emb"], input_ids, axis=0)        # [B, S, H] f32
    x = pallas_embeddings(x_words, params["pos_emb"][:S],
                          params["type_emb"][0:1],                    # token_type_ids==0
                          params["emb_ln_g"], params["emb_ln_b"])     # [B, S, H] bf16

    # additive attention mask over key positions, [B, 1, S], f32
    mask_add = (1.0 - attention_mask.astype(jnp.float32))[:, None, :] * -1e9

    # --- transformer encoder layers ---
    for lp in params["layers"]:
        x = pallas_attention_block(x, mask_add, lp["w_qkv"], lp["b_qkv"],
                                   lp["w_o"], lp["b_o"], lp["ln1_g"], lp["ln1_b"], nH)
        x = pallas_ffn_ln(x.reshape(B * S, H), lp["w_i"], lp["b_i"],
                          lp["w_out"], lp["b_out"],
                          lp["ln2_g"], lp["ln2_b"]).reshape(B, S, H)

    # --- CLS pooling ---
    cls = x[:, 0, :]                                                  # [B, H] bf16

    # --- fused projection head + classifier ---
    s1, t1 = _bn_eval(params["bn1"])
    s2, t2 = _bn_eval(params["bn2"])
    projections, logits = pallas_head(
        cls,
        params["proj_w1"], params["proj_b1"], s1, t1,
        params["proj_w2"], params["proj_b2"], s2, t2,
        params["cls_w1"], params["cls_b1"],
        params["cls_w2"], params["cls_b2"])

    if return_logits:
        return projections, logits
    return projections


# ----------------------------------------------------------------------------
if __name__ == "__main__":
    key = jax.random.PRNGKey(0)
    pk, ik = jax.random.split(key)

    # small shapes consistent with the module's forward
    B, S = 2, 8
    H, nH, FFN, L = 32, 4, 64, 2     # hidden_dim, heads, intermediate, num_layers
    P, C = 16, 2                     # projection_dim, num_classes
    V, MP = 100, 16                  # vocab, max positions

    params = init_params(pk, vocab=V, max_pos=MP, H=H, nH=nH, ffn_dim=FFN,
                         L=L, P=P, C=C)
    input_ids = jax.random.randint(ik, (B, S), 0, V, dtype=jnp.int32)
    attention_mask = jnp.ones((B, S), dtype=jnp.int32)

    projections, logits = forward(params, input_ids, attention_mask,
                                  return_logits=True)
    jax.block_until_ready((projections, logits))

    assert projections.shape == (B, P)
    assert logits.shape == (B, C)
    assert bool(jnp.all(jnp.isfinite(projections))) and bool(jnp.all(jnp.isfinite(logits)))
    # L2-normalized rows should have unit norm
    assert bool(jnp.allclose(jnp.linalg.norm(projections, axis=1), 1.0, atol=1e-4))

    print("KERNEL_OK")
</pallas_src>

<mosaic_0001>
module attributes {stable_mosaic.version = 11 : i64} {
  func.func @_emb_kernel(%arg0: i32, %arg1: memref<1x8x32xf32, #tpu.memory_space<vmem>>, %arg2: memref<8x32xf32, #tpu.memory_space<vmem>>, %arg3: memref<1x32xf32, #tpu.memory_space<vmem>>, %arg4: memref<1x32xf32, #tpu.memory_space<vmem>>, %arg5: memref<1x32xf32, #tpu.memory_space<vmem>>, %arg6: memref<1x8x32xbf16, #tpu.memory_space<vmem>>) attributes {dimension_semantics = [#tpu.dimension_semantics<parallel>], iteration_bounds = array<i64: 2>, scalar_prefetch = 0 : i64, scratch_operands = 0 : i64, tpu.core_type = #tpu.core_type<tc>, window_params = [{transform_indices = @transform_0, window_bounds = array<i64: 1, 8, 32>}, {pipeline_mode = #tpu.pipeline_mode<synchronous>, transform_indices = @transform_1, window_bounds = array<i64: 8, 32>}, {pipeline_mode = #tpu.pipeline_mode<synchronous>, transform_indices = @transform_2, window_bounds = array<i64: 1, 32>}, {pipeline_mode = #tpu.pipeline_mode<synchronous>, transform_indices = @transform_3, window_bounds = array<i64: 1, 32>}, {pipeline_mode = #tpu.pipeline_mode<synchronous>, transform_indices = @transform_4, window_bounds = array<i64: 1, 32>}, {transform_indices = @transform_5, window_bounds = array<i64: 1, 8, 32>}]} {
    %c0 = arith.constant 0 : index
    %c0_0 = arith.constant 0 : index
    %c0_1 = arith.constant 0 : index
    %0 = vector.load %arg1[%c0, %c0_0, %c0_1] : memref<1x8x32xf32, #tpu.memory_space<vmem>>, vector<1x8x32xf32>
    %1 = vector.shape_cast %0 : vector<1x8x32xf32> to vector<8x32xf32>
    %c0_2 = arith.constant 0 : index
    %c0_3 = arith.constant 0 : index
    %2 = vector.load %arg2[%c0_2, %c0_3] : memref<8x32xf32, #tpu.memory_space<vmem>>, vector<8x32xf32>
    %3 = arith.addf %1, %2 : vector<8x32xf32>
    %c0_4 = arith.constant 0 : index
    %c0_5 = arith.constant 0 : index
    %4 = vector.load %arg3[%c0_4, %c0_5] : memref<1x32xf32, #tpu.memory_space<vmem>>, vector<1x32xf32>
    %5 = vector.broadcast %4 : vector<1x32xf32> to vector<8x32xf32>
    %6 = arith.addf %3, %5 : vector<8x32xf32>
    %cst = arith.constant dense<0.000000e+00> : vector<8xf32>
    %7 = vector.multi_reduction <add>, %6, %cst [1] : vector<8x32xf32> to vector<8xf32>
    %8 = vector.shape_cast %7 : vector<8xf32> to vector<8x1xf32>
    %cst_6 = arith.constant 3.200000e+01 : f32
    %9 = vector.broadcast %cst_6 : f32 to vector<8x1xf32>
    %10 = arith.divf %8, %9 : vector<8x1xf32>
    %11 = vector.broadcast %10 : vector<8x1xf32> to vector<8x32xf32>
    %12 = arith.subf %6, %11 : vector<8x32xf32>
    %13 = arith.mulf %12, %12 : vector<8x32xf32>
    %cst_7 = arith.constant dense<0.000000e+00> : vector<8xf32>
    %14 = vector.multi_reduction <add>, %13, %cst_7 [1] : vector<8x32xf32> to vector<8xf32>
    %15 = vector.shape_cast %14 : vector<8xf32> to vector<8x1xf32>
    %cst_8 = arith.constant 3.200000e+01 : f32
    %16 = vector.broadcast %cst_8 : f32 to vector<8x1xf32>
    %17 = arith.divf %15, %16 : vector<8x1xf32>
    %cst_9 = arith.constant 9.99999996E-13 : f32
    %18 = vector.broadcast %cst_9 : f32 to vector<8x1xf32>
    %19 = arith.addf %17, %18 : vector<8x1xf32>
    %20 = math.rsqrt %19 : vector<8x1xf32>
    %21 = vector.broadcast %20 : vector<8x1xf32> to vector<8x32xf32>
    %22 = arith.mulf %12, %21 : vector<8x32xf32>
    %c0_10 = arith.constant 0 : index
    %c0_11 = arith.constant 0 : index
    %23 = vector.load %arg4[%c0_10, %c0_11] : memref<1x32xf32, #tpu.memory_space<vmem>>, vector<1x32xf32>
    %24 = vector.broadcast %23 : vector<1x32xf32> to vector<8x32xf32>
    %25 = arith.mulf %22, %24 : vector<8x32xf32>
    %c0_12 = arith.constant 0 : index
    %c0_13 = arith.constant 0 : index
    %26 = vector.load %arg5[%c0_12, %c0_13] : memref<1x32xf32, #tpu.memory_space<vmem>>, vector<1x32xf32>
    %27 = vector.broadcast %26 : vector<1x32xf32> to vector<8x32xf32>
    %28 = arith.addf %25, %27 : vector<8x32xf32>
    %29 = arith.truncf %28 : vector<8x32xf32> to vector<8x32xbf16>
    %c0_14 = arith.constant 0 : index
    %c0_15 = arith.constant 0 : index
    %c0_16 = arith.constant 0 : index
    %30 = vector.load %arg6[%c0_14, %c0_15, %c0_16] : memref<1x8x32xbf16, #tpu.memory_space<vmem>>, vector<1x8x32xbf16>
    %31 = vector.shape_cast %30 : vector<1x8x32xbf16> to vector<8x32xbf16>
    %32 = vector.shape_cast %29 : vector<8x32xbf16> to vector<1x8x32xbf16>
    tpu.vector_store %arg6[%c0_14, %c0_15, %c0_16], %32 {strides = array<i32>} : memref<1x8x32xbf16, #tpu.memory_space<vmem>>, vector<1x8x32xbf16>,
    return
  }
  func.func @transform_0(%arg0: i32) -> (i32, i32, i32) {
    %c0_i32 = arith.constant 0 : i32
    %c0_i32_0 = arith.constant 0 : i32
    %c0_i32_1 = arith.constant 0 : i32
    return %arg0, %c0_i32, %c0_i32_0 : i32, i32, i32
  }
  func.func @transform_1(%arg0: i32) -> (i32, i32) {
    %c0_i32 = arith.constant 0 : i32
    %c0_i32_0 = arith.constant 0 : i32
    %c0_i32_1 = arith.constant 0 : i32
    return %c0_i32, %c0_i32_0 : i32, i32
  }
  func.func @transform_2(%arg0: i32) -> (i32, i32) {
    %c0_i32 = arith.constant 0 : i32
    %c0_i32_0 = arith.constant 0 : i32
    %c0_i32_1 = arith.constant 0 : i32
    return %c0_i32, %c0_i32_0 : i32, i32
  }
  func.func @transform_3(%arg0: i32) -> (i32, i32) {
    %c0_i32 = arith.constant 0 : i32
    %c0_i32_0 = arith.constant 0 : i32
    %c0_i32_1 = arith.constant 0 : i32
    return %c0_i32, %c0_i32_0 : i32, i32
  }
  func.func @transform_4(%arg0: i32) -> (i32, i32) {
    %c0_i32 = arith.constant 0 : i32
    %c0_i32_0 = arith.constant 0 : i32
    %c0_i32_1 = arith.constant 0 : i32
    return %c0_i32, %c0_i32_0 : i32, i32
  }
  func.func @transform_5(%arg0: i32) -> (i32, i32, i32) {
    %c0_i32 = arith.constant 0 : i32
    %c0_i32_0 = arith.constant 0 : i32
    %c0_i32_1 = arith.constant 0 : i32
    return %arg0, %c0_i32, %c0_i32_0 : i32, i32, i32
  }
}

</mosaic_0001>

<llo_original>
// kernel: tpu_custom_call.1
$region0: #{tpu_custom_call.1}
  #allocation0 [shape = 'u32[]', space=smem, size = 0x4, offset = 0x4, fixed_abs, tag = 'smem constant byte address 0x4 - core index']
  #allocation1 [shape = 'u32[144,128]{1,0:T(1,128)}', space=vmem, size = 0x12000, scoped, tag = 'internal scratch']
  %s0 = inlined_call_operand.hbm [shape: f32[2,8,32], index: 0, kind: input, shape index: {}]
  %s1 = inlined_call_operand.hbm [shape: f32[8,32], index: 1, kind: input, shape index: {}]
  %s2 = inlined_call_operand.vmem [shape: f32[1,32], index: 2, kind: input, shape index: {}]
  %s3 = inlined_call_operand.vmem [shape: f32[1,32], index: 3, kind: input, shape index: {}]
  %s4 = inlined_call_operand.vmem [shape: f32[1,32], index: 4, kind: input, shape index: {}]
  %s5 = inlined_call_operand.hbm [shape: bf16[2,8,32], index: 5, kind: output, shape index: {}]
  %s6 = sld [smem:[#allocation0]]
  $region61: #{tpu_custom_call.1} parent=0
    _
  %s8 = ssub.s32 1, %s6
  %s9 = scalar_select 0, %s8, %s6
  $region1: #{tpu_custom_call.1} parent=0
    #allocation2 [shape = 'u8[8192]{0}', space=vmem, size = 0x2000, scoped, tag = 'input window, operand 0']
    #allocation3 [shape = 's32[2]{0}', space=sflag, size = 0x8, scoped, tag = 'scoped memory for tpu_custom_call.1']
    #allocation4 [shape = 's32[2]{0}', space=sflag, size = 0x8, scoped, tag = 'scoped memory for tpu_custom_call.1']
    #allocation5 [shape = 'u8[4096]{0}', space=vmem, size = 0x1000, scoped, tag = 'input window, operand 1, single buffered']
    #allocation6 [shape = 's32[1]{0}', space=sflag, size = 0x4, scoped, tag = 'scoped memory for tpu_custom_call.1']
    #allocation7 [shape = 'u8[4096]{0}', space=vmem, size = 0x1000, scoped, tag = 'output window, operand 0']
    %10 = vsyncpa [#allocation3], 0
    %s11 = scalar_lea.sflag [#allocation3], 1
    %12 = vsyncpa %s11, 0
    %13 = vsyncpa [#allocation6], 0
    %14 = vsyncpa [#allocation4], 0
    %s15 = scalar_lea.sflag [#allocation4], 1
    %16 = vsyncpa %s15, 0
    loop: start=0, step=1, limit=4
    $region2: #{tpu_custom_call.1} parent=1 // loop_pre_header
      _
    $region3: #{tpu_custom_call.1} parent=1 // loop_header
      %s18 = sphi 0, %s22
      %p19 = scmp.ge.s32.totalorder %s18, 4
      %s28 = sphi 0, %s30
      %s31 = sphi 0, %s28
      %s32 = sphi 0, %s31
      %s48 = sphi 0, %s32
      %s52 = sphi 0, %s52
      %s54 = sphi 0, %s52
      %s55 = sphi 0, %s54
      %s69 = sphi 0, %s55
      %s73 = sphi 0, %s73
      %s75 = sphi 0, %s73
      %s76 = sphi 0, %s75
      %s90 = sphi 0, %s76
      %s94 = sphi 0, %s94
      %s96 = sphi 0, %s94
      %s97 = sphi 0, %s96
      %s111 = sphi 0, %s97
      %s115 = sphi 0, %s115
      %s117 = sphi 0, %s115
      %s118 = sphi 0, %s117
      %s132 = sphi 0, %s118
      %s138 = sphi 0, %s140
      %s141 = sphi 0, %s138
      %s142 = sphi 0, %s141
      %s158 = sphi 0, %s142
    $region4: #{tpu_custom_call.1} parent=1 // loop_header_branch
      %21 = sbr.rel (%p19) target = $region8
    $region5: #{tpu_custom_call.1} parent=1 // loop_body
      %s23 = ssub.s32 %s18, 1
      %s24 = ssub.s32 %s18, 2
      %s25 = sadd.s32 %s18, 1
      %s26 = ssub.s32 %s18, %s25
      %p27 = scmp.eq.s32.totalorder %s26, 0
      %s29 = sadd.s32 %s28, 1
      %s30 = scalar_select %p27, %s28, %s29
      %p33 = pneg %p27
      %p34 = scmp.eq.s32.totalorder %s18, 1
      %p35 = por %p33, %p34
      %p36 = scmp.ne.s32.totalorder %s28, %s31
      %p37 = scmp.eq.s32.totalorder %s18, 0
      %p38 = por %p36, %p37
      %p39 = scmp.ne.s32.totalorder %s28, %s31
      %p40 = scmp.eq.s32.totalorder %s23, 1
      %p41 = por %p39, %p40
      %p42 = scmp.ne.s32.totalorder %s31, %s32
      %p43 = scmp.eq.s32.totalorder %s23, 0
      %p44 = por %p42, %p43
      %p45 = scmp.ne.s32.totalorder %s31, %s32
      %p46 = scmp.eq.s32.totalorder %s24, 1
      %p47 = por %p45, %p46
      %p49 = scmp.ne.s32.totalorder %s32, %s48
      %p50 = scmp.eq.s32.totalorder %s24, 0
      %p51 = por %p49, %p50
      %s53 = sadd.s32 %s52, 1
      %p56 = scmp.eq.s32.totalorder %s18, 1
      %p57 = scmp.ne.s32.totalorder %s52, %s54
      %p58 = scmp.eq.s32.totalorder %s18, 0
      %p59 = por %p57, %p58
      %p60 = scmp.ne.s32.totalorder %s52, %s54
      %p61 = scmp.eq.s32.totalorder %s23, 1
      %p62 = por %p60, %p61
      %p63 = scmp.ne.s32.totalorder %s54, %s55
      %p64 = scmp.eq.s32.totalorder %s23, 0
      %p65 = por %p63, %p64
      %p66 = scmp.ne.s32.totalorder %s54, %s55
      %p67 = scmp.eq.s32.totalorder %s24, 1
      %p68 = por %p66, %p67
      %p70 = scmp.ne.s32.totalorder %s55, %s69
      %p71 = scmp.eq.s32.totalorder %s24, 0
      %p72 = por %p70, %p71
      %s74 = sadd.s32 %s73, 1
      %p77 = scmp.eq.s32.totalorder %s18, 1
      %p78 = scmp.ne.s32.totalorder %s73, %s75
      %p79 = scmp.eq.s32.totalorder %s18, 0
      %p80 = por %p78, %p79
      %p81 = scmp.ne.s32.totalorder %s73, %s75
      %p82 = scmp.eq.s32.totalorder %s23, 1
      %p83 = por %p81, %p82
      %p84 = scmp.ne.s32.totalorder %s75, %s76
      %p85 = scmp.eq.s32.totalorder %s23, 0
      %p86 = por %p84, %p85
      %p87 = scmp.ne.s32.totalorder %s75, %s76
      %p88 = scmp.eq.s32.totalorder %s24, 1
      %p89 = por %p87, %p88
      %p91 = scmp.ne.s32.totalorder %s76, %s90
      %p92 = scmp.eq.s32.totalorder %s24, 0
      %p93 = por %p91, %p92
      %s95 = sadd.s32 %s94, 1
      %p98 = scmp.eq.s32.totalorder %s18, 1
      %p99 = scmp.ne.s32.totalorder %s94, %s96
      %p100 = scmp.eq.s32.totalorder %s18, 0
      %p101 = por %p99, %p100
      %p102 = scmp.ne.s32.totalorder %s94, %s96
      %p103 = scmp.eq.s32.totalorder %s23, 1
      %p104 = por %p102, %p103
      %p105 = scmp.ne.s32.totalorder %s96, %s97
      %p106 = scmp.eq.s32.totalorder %s23, 0
      %p107 = por %p105, %p106
      %p108 = scmp.ne.s32.totalorder %s96, %s97
      %p109 = scmp.eq.s32.totalorder %s24, 1
      %p110 = por %p108, %p109
      %p112 = scmp.ne.s32.totalorder %s97, %s111
      %p113 = scmp.eq.s32.totalorder %s24, 0
      %p114 = por %p112, %p113
      %s116 = sadd.s32 %s115, 1
      %p119 = scmp.eq.s32.totalorder %s18, 1
      %p120 = scmp.ne.s32.totalorder %s115, %s117
      %p121 = scmp.eq.s32.totalorder %s18, 0
      %p122 = por %p120, %p121
      %p123 = scmp.ne.s32.totalorder %s115, %s117
      %p124 = scmp.eq.s32.totalorder %s23, 1
      %p125 = por %p123, %p124
      %p126 = scmp.ne.s32.totalorder %s117, %s118
      %p127 = scmp.eq.s32.totalorder %s23, 0
      %p128 = por %p126, %p127
      %p129 = scmp.ne.s32.totalorder %s117, %s118
      %p130 = scmp.eq.s32.totalorder %s24, 1
      %p131 = por %p129, %p130
      %p133 = scmp.ne.s32.totalorder %s118, %s132
      %p134 = scmp.eq.s32.totalorder %s24, 0
      %p135 = por %p133, %p134
      %s136 = ssub.s32 %s18, %s25
      %p137 = scmp.eq.s32.totalorder %s136, 0
      %s139 = sadd.s32 %s138, 1
      %s140 = scalar_select %p137, %s138, %s139
      %p143 = pneg %p137
      %p144 = scmp.eq.s32.totalorder %s18, 1
      %p145 = por %p143, %p144
      %p146 = scmp.ne.s32.totalorder %s138, %s141
      %p147 = scmp.eq.s32.totalorder %s18, 0
      %p148 = por %p146, %p147
      %p149 = scmp.ne.s32.totalorder %s138, %s141
      %p150 = scmp.eq.s32.totalorder %s23, 1
      %p151 = por %p149, %p150
      %p152 = scmp.ne.s32.totalorder %s141, %s142
      %p153 = scmp.eq.s32.totalorder %s23, 0
      %p154 = por %p152, %p153
      %p155 = scmp.ne.s32.totalorder %s141, %s142
      %p156 = scmp.eq.s32.totalorder %s24, 1
      %p157 = por %p155, %p156
      %p159 = scmp.ne.s32.totalorder %s142, %s158
      %p160 = scmp.eq.s32.totalorder %s24, 0
      %p161 = por %p159, %p160
      %p162 = scmp.le.s32.totalorder 1, %s18
      %p163 = scmp.lt.s32.totalorder %s18, 3
      %p164 = pnand %p162, %p163
      %p165 = pneg %p164
      // Predicated region
      $region9: #{tpu_custom_call.1} parent=5 // pred_check
        _
      $region10: #{tpu_custom_call.1} parent=5 // pred_check_branch
        %167 = sbr.rel (%p164) target = $region12
      $region11: #{tpu_custom_call.1} parent=5 // pred_region
        %s168 = ssub.s32 %s18, 1
        // Predicated region
        $region13: #{tpu_custom_call.1} parent=11 // pred_check
          %p169 = pneg %p65
        $region14: #{tpu_custom_call.1} parent=11 // pred_check_branch
          %171 = sbr.rel (%p169) target = $region16
        $region15: #{tpu_custom_call.1} parent=11 // pred_region
          %s173 = ssub.s32 128, 128
          %174 = vsyncadd [#allocation6], %s173
          %s176 = sshll.u32 [#allocation5], 4
          %s177 = int_to_ptr.vmem [resolvable:$true] %s176
          %179 = dma.hbm_to_vmem [thread:$0]  %s1, 128, %s177, [#allocation6]
        $region16: #{tpu_custom_call.1} parent=11 // pred_fallthru
          _
        // Predicated region
        $region17: #{tpu_custom_call.1} parent=11 // pred_check
          %p180 = pneg %p86
        $region18: #{tpu_custom_call.1} parent=11 // pred_check_branch
          %182 = sbr.rel (%p180) target = $region20
        $region19: #{tpu_custom_call.1} parent=11 // pred_region
          _
        $region20: #{tpu_custom_call.1} parent=11 // pred_fallthru
          _
        // Predicated region
        $region21: #{tpu_custom_call.1} parent=11 // pred_check
          %p183 = pneg %p107
        $region22: #{tpu_custom_call.1} parent=11 // pred_check_branch
          %185 = sbr.rel (%p183) target = $region24
        $region23: #{tpu_custom_call.1} parent=11 // pred_region
          _
        $region24: #{tpu_custom_call.1} parent=11 // pred_fallthru
          _
        // Predicated region
        $region25: #{tpu_custom_call.1} parent=11 // pred_check
          %p186 = pneg %p128
        $region26: #{tpu_custom_call.1} parent=11 // pred_check_branch
          %188 = sbr.rel (%p186) target = $region28
        $region27: #{tpu_custom_call.1} parent=11 // pred_region
          _
        $region28: #{tpu_custom_call.1} parent=11 // pred_fallthru
          _
      $region12: #{tpu_custom_call.1} parent=5 // pred_fallthru
        _
      %p189 = scmp.lt.s32.totalorder %s18, 2
      // Predicated region
      $region29: #{tpu_custom_call.1} parent=5 // pred_check
        %p190 = pneg %p189
      $region30: #{tpu_custom_call.1} parent=5 // pred_check_branch
        %192 = sbr.rel (%p190) target = $region32
      $region31: #{tpu_custom_call.1} parent=5 // pred_region
        // Predicated region
        $region33: #{tpu_custom_call.1} parent=31 // pred_check
          %p193 = pneg %p38
        $region34: #{tpu_custom_call.1} parent=31 // pred_check_branch
          %195 = sbr.rel (%p193) target = $region36
        $region35: #{tpu_custom_call.1} parent=31 // pred_region
          %s196 = sand.u32 %s28, 1
          %s197 = scalar_lea.sflag [#allocation3], %s196
          %s198 = sand.u32 %s28, 1
          %s199 = smul.addr %s198, 8
          %s200 = scalar_lea.vmem [#allocation2], %s199
          %s202 = ssub.s32 128, 128
          %203 = vsyncadd %s197, %s202
          %s204 = smul.addr %s18, 128
          %s205 = scalar_lea.hbm %s0, %s204
          %s207 = sshll.u32 %s200, 4
          %s208 = int_to_ptr.vmem [resolvable:$true] %s207
          %210 = dma.hbm_to_vmem [thread:$0]  %s205, 128, %s208, %s197
        $region36: #{tpu_custom_call.1} parent=31 // pred_fallthru
          _
      $region32: #{tpu_custom_call.1} parent=5 // pred_fallthru
        _
      %p211 = scmp.le.s32.totalorder 1, %s18
      %p212 = scmp.lt.s32.totalorder %s18, 3
      %p213 = pnand %p211, %p212
      %p214 = pneg %p213
      // Predicated region
      $region37: #{tpu_custom_call.1} parent=5 // pred_check
        _
      $region38: #{tpu_custom_call.1} parent=5 // pred_check_branch
        %216 = sbr.rel (%p213) target = $region40
      $region39: #{tpu_custom_call.1} parent=5 // pred_region
        %s217 = ssub.s32 %s18, 1
        %s218 = sand.u32 %s31, 1
        %s219 = scalar_lea.sflag [#allocation3], %s218
        %s220 = sand.u32 %s31, 1
        %s221 = smul.addr %s220, 8
        %s222 = scalar_lea.vmem [#allocation2], %s221
        // Predicated region
        $region41: #{tpu_custom_call.1} parent=39 // pred_check
          %p223 = pneg %p44
        $region42: #{tpu_custom_call.1} parent=39 // pred_check_branch
          %225 = sbr.rel (%p223) target = $region44
        $region43: #{tpu_custom_call.1} parent=39 // pred_region
          %226 = dma.done %s219, 128
        $region44: #{tpu_custom_call.1} parent=39 // pred_fallthru
          _
        // Predicated region
        $region45: #{tpu_custom_call.1} parent=39 // pred_check
          %p227 = pneg %p65
        $region46: #{tpu_custom_call.1} parent=39 // pred_check_branch
          %229 = sbr.rel (%p227) target = $region48
        $region47: #{tpu_custom_call.1} parent=39 // pred_region
          %230 = dma.done [#allocation6], 128
        $region48: #{tpu_custom_call.1} parent=39 // pred_fallthru
          _
        %s231 = sand.u32 %s31, 1
        %s232 = scalar_lea.sflag [#allocation3], %s231
        %s233 = sand.u32 %s31, 1
        %s234 = smul.addr %s233, 8
        %s235 = scalar_lea.vmem [#allocation2], %s234
        %p236 = pneg %p44
        %p237 = pneg %p41
        %p238 = pneg %p65
        %p239 = pneg %p62
        %p240 = pneg %p86
        %p241 = pneg %p83
        %p242 = pneg %p107
        %p243 = pneg %p104
        %p244 = pneg %p128
        %p245 = pneg %p125
        %p246 = pneg %p154
        %p247 = pneg %p151
        %s248 = sand.u32 %s141, 1
        %s249 = scalar_lea.sflag [#allocation4], %s248
        %s250 = sand.u32 %s141, 1
        %s251 = smul.addr %s250, 4
        %s252 = scalar_lea.vmem [#allocation7], %s251
        %v253 = vld [vmem:[%s222] sm:$0xff]
        %v254 = vld [vmem:[#allocation5] sm:$0xff]
        %v255 = vadd.f32 %v253, %v254
        %v256 = vld [vmem:[%s2] sm:$0x1]
        %v258 = vlaneseq
        %v259 = vshrl.u32 %v258, 7
        %v260 = vsub.s32 0, %v259
        %v261 = vrot.slane %v256, %v260
        %v263 = vadd.f32 %v255, %v261
        %vm264 = vcmask 261120
        %v265 = vsel %vm264, %v263, 0.0
        %266 = vadd.xlane.f32.xlu0 %v265
        %v267 = vpop.xlane.xlu0 %266
        %v268 = vrcp.pop 32.0
        %v269 = vmul.f32 %v267, %v268
        %v270 = vsub.f32 %v263, %v269
        %v271 = vmul.f32 %v270, %v270
        %v272 = vsel %vm264, %v271, 0.0
        %273 = vadd.xlane.f32.xlu0 %v272
        %v274 = vpop.xlane.xlu0 %273
        %v275 = vmul.f32 %v274, %v268
        %v276 = vadd.f32 %v275, 1e-12
        %v277 = vrsqrt.pop %v276
        %v278 = vmul.f32 %v270, %v277
        %v279 = vld [vmem:[%s3] sm:$0x1]
        %v281 = vlaneseq
        %v282 = vshrl.u32 %v281, 7
        %v283 = vsub.s32 0, %v282
        %v284 = vrot.slane %v279, %v283
        %v286 = vmul.f32 %v278, %v284
        %v287 = vld [vmem:[%s4] sm:$0x1]
        %v289 = vlaneseq
        %v290 = vshrl.u32 %v289, 7
        %v291 = vsub.s32 0, %v290
        %v292 = vrot.slane %v287, %v291
        %v294 = vadd.f32 %v286, %v292
        %v295 = vpack.c.bf16 %v294, %v294
        %vm296 = vcmask 257024
        %297 = vst.msk [vmem:[%s252] sm:$0xf] %vm296, %v295
        %s298 = sand.u32 %s141, 1
        %s299 = scalar_lea.sflag [#allocation4], %s298
        %s300 = sand.u32 %s141, 1
        %s301 = smul.addr %s300, 4
        %s302 = scalar_lea.vmem [#allocation7], %s301
        // Predicated region
        $region49: #{tpu_custom_call.1} parent=39 // pred_check
          %p303 = pneg %p151
        $region50: #{tpu_custom_call.1} parent=39 // pred_check_branch
          %305 = sbr.rel (%p303) target = $region52
        $region51: #{tpu_custom_call.1} parent=39 // pred_region
          %s307 = ssub.s32 64, 64
          %308 = vsyncadd %s299, %s307
          %s309 = smul.addr %s23, 64
          %s310 = scalar_lea.hbm %s5, %s309
          %s312 = sshll.u32 %s302, 4
          %s313 = int_to_ptr.vmem [resolvable:$true] %s312
          %315 = dma.vmem_to_hbm [thread:$0]  %s313, 64, %s310, %s299
        $region52: #{tpu_custom_call.1} parent=39 // pred_fallthru
          _
      $region40: #{tpu_custom_call.1} parent=5 // pred_fallthru
        _
      %p316 = scmp.le.s32.totalorder 2, %s18
      // Predicated region
      $region53: #{tpu_custom_call.1} parent=5 // pred_check
        %p317 = pneg %p316
      $region54: #{tpu_custom_call.1} parent=5 // pred_check_branch
        %319 = sbr.rel (%p317) target = $region56
      $region55: #{tpu_custom_call.1} parent=5 // pred_region
        %s320 = ssub.s32 %s18, 2
        // Predicated region
        $region57: #{tpu_custom_call.1} parent=55 // pred_check
          %p321 = pneg %p157
        $region58: #{tpu_custom_call.1} parent=55 // pred_check_branch
          %323 = sbr.rel (%p321) target = $region60
        $region59: #{tpu_custom_call.1} parent=55 // pred_region
          %s324 = sand.u32 %s142, 1
          %s325 = scalar_lea.sflag [#allocation4], %s324
          %s326 = sand.u32 %s142, 1
          %s327 = smul.addr %s326, 4
          %s328 = scalar_lea.vmem [#allocation7], %s327
          %329 = dma.done %s325, 64
        $region60: #{tpu_custom_call.1} parent=55 // pred_fallthru
          _
      $region56: #{tpu_custom_call.1} parent=5 // pred_fallthru
        _
    $region6: #{tpu_custom_call.1} parent=1 // loop_footer
      %s22 = sadd.s32 1, %s18
    $region7: #{tpu_custom_call.1} parent=1 // loop_footer_branch
      %17 = sbr.rel target = $region3
    $region8: #{tpu_custom_call.1} parent=1 // loop_exit
      _
    %330 = vsyncpa [#allocation3], 1
    %s331 = scalar_lea.sflag [#allocation3], 1
    %332 = vsyncpa %s331, 1
    %333 = vsyncpa [#allocation6], 1
    %334 = vsyncpa [#allocation4], 1
    %s335 = scalar_lea.sflag [#allocation4], 1
    %336 = vsyncpa %s335, 1

</llo_original>
